<compile_context>
chip_gen: v7x
topology: tpu7x:2x2x1
jax: 0.10.0
libtpu: 0.0.40
codegen_flags: <defaults>
</compile_context>

<pallas_src>
import math
import functools

import jax
import jax.numpy as jnp
from jax import lax
from jax.experimental import pallas as pl
from jax.experimental.pallas import tpu as pltpu


# ----------------------------------------------------------------------------
# Tiled Linear: y = x @ W^T + b.  W is stored pre-transposed as (in, out) so
# the kernel contracts directly on the MXU without an in-kernel transpose.
# ----------------------------------------------------------------------------
def _linear_kernel(x_ref, w_ref, b_ref, o_ref, acc_ref):
    @pl.when(pl.program_id(2) == 0)
    def _init():
        acc_ref[...] = jnp.zeros_like(acc_ref)

    acc_ref[...] += jnp.dot(x_ref[...], w_ref[...],
                            preferred_element_type=jnp.float32)

    @pl.when(pl.program_id(2) == pl.num_programs(2) - 1)
    def _finalize():
        o_ref[...] = (acc_ref[...] + b_ref[...]).astype(o_ref.dtype)


def _pick_tile(dim, target):
    # Use `target` when it tiles the dim exactly; otherwise fall back to the
    # full dim (a block equal to the array dim is always a legal block shape).
    if dim >= target and dim % target == 0:
        return target
    return dim


def pallas_linear(x2d, w_t, b, *, tm=256, tn=256, tk=512):
    M, K = x2d.shape
    Kw, N = w_t.shape
    assert K == Kw
    tm, tn, tk = _pick_tile(M, tm), _pick_tile(N, tn), _pick_tile(K, tk)
    grid = (M // tm, N // tn, K // tk)
    return pl.pallas_call(
        _linear_kernel,
        out_shape=jax.ShapeDtypeStruct((M, N), x2d.dtype),
        grid=grid,
        in_specs=[
            pl.BlockSpec((tm, tk), lambda i, j, k: (i, k)),
            pl.BlockSpec((tk, tn), lambda i, j, k: (k, j)),
            pl.BlockSpec((1, tn), lambda i, j, k: (0, j)),
        ],
        out_specs=pl.BlockSpec((tm, tn), lambda i, j, k: (i, j)),
        scratch_shapes=[pltpu.VMEM((tm, tn), jnp.float32)],
        compiler_params=pltpu.CompilerParams(
            dimension_semantics=("parallel", "parallel", "arbitrary")),
    )(x2d, w_t, b.reshape(1, N))


# ----------------------------------------------------------------------------
# Dilated attention.  The closed-form level-intersection mask
#     causal & (row//4 == col//4) & (row%R == col%R) & (row%R == h%R),  R=T//2
# confines every finite score to the aligned 4-wide diagonal groups, so with Q
# and K tiled identically (tile = power of 2 >= 4, or tile == T) only the
# diagonal KV tile contributes.  Each grid step therefore loads exactly one
# (tile, D) block of Q, K, V, cos, sin, applies RoPE, computes per-head scores
# on the MXU, masks, runs a full softmax over the block, and stores one
# lane-dense (tile, D) output block.
# ----------------------------------------------------------------------------
def _dilated_attn_kernel(q_ref, k_ref, v_ref, cos_ref, sin_ref, o_ref, *,
                         n_heads, d_head, n_levels, block):
    i = pl.program_id(1)
    D = n_heads * d_head
    R = 1 << (n_levels - 1)          # largest dilation rate (== T // 2)
    half = D // 2

    cos = cos_ref[...]
    sin = sin_ref[...]

    # Fused RoPE on the full hidden dim (exactly as the reference does,
    # pre head-split): x*cos + rotate_half(x)*sin.
    def rope(x):
        rot = jnp.concatenate([-x[:, half:], x[:, :half]], axis=-1)
        return x * cos + rot * sin

    # Active at every level -> value is log2(T) * (q . k).  Fold the scale
    # into q once on the (tile, D) block instead of per-head (tile, tile).
    q = rope(q_ref[0]) * float(n_levels)       # (tile, D)
    k = rope(k_ref[0])                         # (tile, D)
    v = v_ref[0]                               # (tile, D)

    base = i * block
    row = base + lax.broadcasted_iota(jnp.int32, (block, block), 0)
    col = base + lax.broadcasted_iota(jnp.int32, (block, block), 1)
    row_mod = row % R
    base_mask = (row >= col) & ((row // 4) == (col // 4)) \
                & (row_mod == (col % R))

    outs = []
    for h in range(n_heads):
        hs = slice(h * d_head, (h + 1) * d_head)
        s = lax.dot_general(q[:, hs], k[:, hs], (((1,), (1,)), ((), ())),
                            preferred_element_type=jnp.float32)  # (tile, tile)
        logits = jnp.where(base_mask & (row_mod == (h % R)), s, -jnp.inf)

        m = jnp.max(logits, axis=-1, keepdims=True)
        # Rows that are fully masked have m = -inf; use a finite surrogate in
        # the exponent so no spurious NaN leaks into p / l.
        m_safe = jnp.where(m == -jnp.inf, 0.0, m)
        p = jnp.exp(logits - m_safe)
        l = jnp.sum(p, axis=-1, keepdims=True)
        o_h = jnp.dot(p, v[:, hs], preferred_element_type=jnp.float32)
        # torch.softmax over an all -inf row is NaN -> NaN output row.
        outs.append(jnp.where(l == 0.0, jnp.nan, o_h / l))

    # single lane-dense (tile, D) store
    o_ref[0] = jnp.concatenate(outs, axis=-1).astype(o_ref.dtype)


def dilated_attention_pallas(q, k, v, cos, sin, *, n_heads, block_q=128):
    B, T, D = q.shape
    assert D % n_heads == 0
    assert T >= 2 and (T & (T - 1)) == 0, "sequence length must be a power of 2"
    n_levels = int(math.log2(T))
    d_head = D // n_heads
    tile = min(block_q, T)           # power of 2; multiple of 4 whenever T >= 4
    grid = (B, T // tile)

    kernel = functools.partial(
        _dilated_attn_kernel, n_heads=n_heads, d_head=d_head,
        n_levels=n_levels, block=tile)

    qkv_spec = pl.BlockSpec((1, tile, D), lambda b, i: (b, i, 0))
    cs_spec = pl.BlockSpec((tile, D), lambda b, i: (i, 0))

    return pl.pallas_call(
        kernel,
        out_shape=jax.ShapeDtypeStruct((B, T, D), q.dtype),
        grid=grid,
        in_specs=[qkv_spec, qkv_spec, qkv_spec, cs_spec, cs_spec],
        out_specs=pl.BlockSpec((1, tile, D), lambda b, i: (b, i, 0)),
        compiler_params=pltpu.CompilerParams(
            dimension_semantics=("parallel", "parallel")),
    )(q, k, v, cos, sin)


# ----------------------------------------------------------------------------
# Module glue (parameters, RoPE cache)
# ----------------------------------------------------------------------------
class DilatedAttentionPallas:
    def __init__(self, dim, n_heads, max_len, key):
        assert dim % n_heads == 0
        self.dim = dim
        self.n_heads = n_heads
        self.max_len = max_len

        # LlamaRotaryEmbedding cache (base = 15000), full hidden dim.
        inv_freq = 1.0 / (15000.0 ** (jnp.arange(0, dim, 2, dtype=jnp.float32) / dim))
        t = jnp.arange(max_len, dtype=jnp.float32)
        freqs = jnp.einsum("i,j->ij", t, inv_freq)
        emb = jnp.concatenate([freqs, freqs], axis=-1)        # (max_len, dim)
        self.cos_cached = jnp.cos(emb).astype(jnp.float32)
        self.sin_cached = jnp.sin(emb).astype(jnp.float32)

        # Deterministic Linear parameters (torch default U(-1/sqrt(in), 1/sqrt(in))).
        keys = jax.random.split(key, 8)
        bound = 1.0 / math.sqrt(dim)

        def init_w(k):   # torch stores W as (out, in); pre-transpose once -> (in, out)
            return jax.random.uniform(k, (dim, dim), jnp.float32, -bound, bound).T

        def init_b(k):
            return jax.random.uniform(k, (dim,), jnp.float32, -bound, bound)

        self.wq_t, self.bq = init_w(keys[0]), init_b(keys[1])
        self.wk_t, self.bk = init_w(keys[2]), init_b(keys[3])
        self.wv_t, self.bv = init_w(keys[4]), init_b(keys[5])
        self.wo_t, self.bo = init_w(keys[6]), init_b(keys[7])

    def __call__(self, x):
        B, T, D = x.shape
        x2d = x.reshape(B * T, D)

        Q = pallas_linear(x2d, self.wq_t, self.bq).reshape(B, T, D)
        K = pallas_linear(x2d, self.wk_t, self.bk).reshape(B, T, D)
        V = pallas_linear(x2d, self.wv_t, self.bv).reshape(B, T, D)

        cos = self.cos_cached[:T]   # (T, D)
        sin = self.sin_cached[:T]

        # RoPE is fused into the attention kernel; heads are split inside the
        # kernel via static column slices -> no host-side (B,H,T,dh) transposes.
        out = dilated_attention_pallas(Q, K, V, cos, sin, n_heads=self.n_heads)

        out = pallas_linear(out.reshape(B * T, D), self.wo_t, self.bo)
        return out.reshape(B, T, D)


# ----------------------------------------------------------------------------
if __name__ == "__main__":
    B, T, D, H = 2, 16, 32, 4
    max_len = 64

    root = jax.random.PRNGKey(0)
    k_param, k_x = jax.random.split(root)

    module = DilatedAttentionPallas(dim=D, n_heads=H, max_len=max_len, key=k_param)
    x = jax.random.normal(k_x, (B, T, D), dtype=jnp.float32)

    y = module(x)
    jax.block_until_ready(y)

    assert y.shape == (B, T, D)
    # NOTE: like the PyTorch reference, query rows whose dilated+causal mask is
    # entirely -inf produce NaN after softmax; that behavior is intentionally
    # preserved (so most of the final output is NaN by construction).
    print("KERNEL_OK")
</pallas_src>

<mosaic_0001>
module attributes {stable_mosaic.version = 11 : i64} {
  func.func @_linear_kernel(%arg0: i32, %arg1: i32, %arg2: i32, %arg3: memref<32x32xf32, #tpu.memory_space<vmem>>, %arg4: memref<32x32xf32, #tpu.memory_space<vmem>>, %arg5: memref<1x32xf32, #tpu.memory_space<vmem>>, %arg6: memref<32x32xf32, #tpu.memory_space<vmem>>, %arg7: memref<32x32xf32, #tpu.memory_space<vmem>>) attributes {dimension_semantics = [#tpu.dimension_semantics<parallel>, #tpu.dimension_semantics<parallel>, #tpu.dimension_semantics<arbitrary>], iteration_bounds = array<i64: 1, 1, 1>, scalar_prefetch = 0 : i64, scratch_operands = 1 : i64, tpu.core_type = #tpu.core_type<tc>, window_params = [{transform_indices = @transform_0, window_bounds = array<i64: 32, 32>}, {transform_indices = @transform_1, window_bounds = array<i64: 32, 32>}, {transform_indices = @transform_2, window_bounds = array<i64: 1, 32>}, {transform_indices = @transform_3, window_bounds = array<i64: 32, 32>}]} {
    %c0_i32 = arith.constant 0 : i32
    %0 = arith.cmpi eq, %arg2, %c0_i32 : i32
    %1 = arith.extui %0 : i1 to i32
    %c0_i32_0 = arith.constant 0 : i32
    %2 = arith.cmpi ne, %1, %c0_i32_0 : i32
    scf.if %2 {
      %cst_10 = arith.constant 0.000000e+00 : f32
      %12 = vector.broadcast %cst_10 : f32 to vector<32x32xf32>
      %c0_11 = arith.constant 0 : index
      %c0_12 = arith.constant 0 : index
      %13 = vector.load %arg7[%c0_11, %c0_12] : memref<32x32xf32, #tpu.memory_space<vmem>>, vector<32x32xf32>
      tpu.vector_store %arg7[%c0_11, %c0_12], %12 {strides = array<i32>} : memref<32x32xf32, #tpu.memory_space<vmem>>, vector<32x32xf32>,
    } else {
    }
    %c0 = arith.constant 0 : index
    %c0_1 = arith.constant 0 : index
    %3 = vector.load %arg7[%c0, %c0_1] : memref<32x32xf32, #tpu.memory_space<vmem>>, vector<32x32xf32>
    %c0_2 = arith.constant 0 : index
    %c0_3 = arith.constant 0 : index
    %4 = vector.load %arg3[%c0_2, %c0_3] : memref<32x32xf32, #tpu.memory_space<vmem>>, vector<32x32xf32>
    %c0_4 = arith.constant 0 : index
    %c0_5 = arith.constant 0 : index
    %5 = vector.load %arg4[%c0_4, %c0_5] : memref<32x32xf32, #tpu.memory_space<vmem>>, vector<32x32xf32>
    %cst = arith.constant dense<0.000000e+00> : vector<32x32xf32>
    %6 = tpu.matmul %4, %5, %cst {dimension_numbers = #tpu.dot_dimension_numbers<[1], [0], [0], [1], [0, 0, 1, 1], [], []>} : vector<32x32xf32>, vector<32x32xf32>, vector<32x32xf32> -> vector<32x32xf32>
    %7 = arith.addf %3, %6 : vector<32x32xf32>
    %c0_6 = arith.constant 0 : index
    %c0_7 = arith.constant 0 : index
    %8 = vector.load %arg7[%c0_6, %c0_7] : memref<32x32xf32, #tpu.memory_space<vmem>>, vector<32x32xf32>
    tpu.vector_store %arg7[%c0_6, %c0_7], %7 {strides = array<i32>} : memref<32x32xf32, #tpu.memory_space<vmem>>, vector<32x32xf32>,
    %c0_i32_8 = arith.constant 0 : i32
    %9 = arith.cmpi eq, %arg2, %c0_i32_8 : i32
    %10 = arith.extui %9 : i1 to i32
    %c0_i32_9 = arith.constant 0 : i32
    %11 = arith.cmpi ne, %10, %c0_i32_9 : i32
    scf.if %11 {
      %c0_10 = arith.constant 0 : index
      %c0_11 = arith.constant 0 : index
      %12 = vector.load %arg7[%c0_10, %c0_11] : memref<32x32xf32, #tpu.memory_space<vmem>>, vector<32x32xf32>
      %c0_12 = arith.constant 0 : index
      %c0_13 = arith.constant 0 : index
      %13 = vector.load %arg5[%c0_12, %c0_13] : memref<1x32xf32, #tpu.memory_space<vmem>>, vector<1x32xf32>
      %14 = vector.broadcast %13 : vector<1x32xf32> to vector<32x32xf32>
      %15 = arith.addf %12, %14 : vector<32x32xf32>
      %c0_14 = arith.constant 0 : index
      %c0_15 = arith.constant 0 : index
      %16 = vector.load %arg6[%c0_14, %c0_15] : memref<32x32xf32, #tpu.memory_space<vmem>>, vector<32x32xf32>
      tpu.vector_store %arg6[%c0_14, %c0_15], %15 {strides = array<i32>} : memref<32x32xf32, #tpu.memory_space<vmem>>, vector<32x32xf32>,
    } else {
    }
    return
  }
  func.func @transform_0(%arg0: i32, %arg1: i32, %arg2: i32) -> (i32, i32) {
    %c0_i32 = arith.constant 0 : i32
    return %arg0, %arg2 : i32, i32
  }
  func.func @transform_1(%arg0: i32, %arg1: i32, %arg2: i32) -> (i32, i32) {
    %c0_i32 = arith.constant 0 : i32
    return %arg2, %arg1 : i32, i32
  }
  func.func @transform_2(%arg0: i32, %arg1: i32, %arg2: i32) -> (i32, i32) {
    %c0_i32 = arith.constant 0 : i32
    %c0_i32_0 = arith.constant 0 : i32
    return %c0_i32, %arg1 : i32, i32
  }
  func.func @transform_3(%arg0: i32, %arg1: i32, %arg2: i32) -> (i32, i32) {
    %c0_i32 = arith.constant 0 : i32
    return %arg0, %arg1 : i32, i32
  }
}

</mosaic_0001>

<llo_original>
// kernel: tpu_custom_call.1
$region0: #{tpu_custom_call.1}
  #allocation0 [shape = 'u32[]', space=smem, size = 0x4, offset = 0x4, fixed_abs, tag = 'smem constant byte address 0x4 - core index']
  #allocation1 [shape = 'u32[144,128]{1,0:T(1,128)}', space=vmem, size = 0x12000, scoped, tag = 'internal scratch']
  #allocation2 [shape = 'f32[32,32]{1,0:T(8,128)}', space=vmem, size = 0x4000, scoped, tag = 'scratch operand']
  %s0 = inlined_call_operand.hbm [shape: f32[32,32], index: 0, kind: input, shape index: {}]
  %s1 = inlined_call_operand.hbm [shape: f32[32,32], index: 1, kind: input, shape index: {}]
  %s2 = inlined_call_operand.vmem [shape: f32[1,32], index: 2, kind: input, shape index: {}]
  %s3 = inlined_call_operand.hbm [shape: f32[32,32], index: 3, kind: output, shape index: {}]
  %s4 = sld [smem:[#allocation0]]
  $region38: #{tpu_custom_call.1} parent=0
    _
  %s6 = ssub.s32 1, %s4
  %s7 = scalar_select 0, %s6, %s4
  $region1: #{tpu_custom_call.1} parent=0
    #allocation3 [shape = 'u8[16384]{0}', space=vmem, size = 0x4000, scoped, tag = 'input window, operand 0, single buffered']
    #allocation4 [shape = 's32[1]{0}', space=sflag, size = 0x4, scoped, tag = 'scoped memory for tpu_custom_call.1']
    #allocation5 [shape = 's32[1]{0}', space=sflag, size = 0x4, scoped, tag = 'scoped memory for tpu_custom_call.1']
    #allocation6 [shape = 'u8[16384]{0}', space=vmem, size = 0x4000, scoped, tag = 'input window, operand 1, single buffered']
    #allocation7 [shape = 's32[1]{0}', space=sflag, size = 0x4, scoped, tag = 'scoped memory for tpu_custom_call.1']
    #allocation8 [shape = 'u8[16384]{0}', space=vmem, size = 0x4000, scoped, tag = 'output window, operand 0, single buffered']
    %8 = vsyncpa [#allocation4], 0
    %9 = vsyncpa [#allocation7], 0
    %10 = vsyncpa [#allocation5], 0
    // Predicated region
    $region2: #{tpu_custom_call.1} parent=1 // pred_check
      _
    $region3: #{tpu_custom_call.1} parent=1 // pred_check_branch
      %12 = sbr.rel (0) target = $region5
    $region4: #{tpu_custom_call.1} parent=1 // pred_region
      %s14 = ssub.s32 512, 512
      %15 = vsyncadd [#allocation4], %s14
      %s16 = sshll.u32 [#allocation3], 4
      %s17 = int_to_ptr.vmem [resolvable:$true] %s16
      %22 = dma.hbm_to_vmem [thread:$0]  %s0, 512, %s17, [#allocation4], 128, 128, 8
    $region5: #{tpu_custom_call.1} parent=1 // pred_fallthru
      _
    // Predicated region
    $region6: #{tpu_custom_call.1} parent=1 // pred_check
      _
    $region7: #{tpu_custom_call.1} parent=1 // pred_check_branch
      %24 = sbr.rel (0) target = $region9
    $region8: #{tpu_custom_call.1} parent=1 // pred_region
      %s26 = ssub.s32 512, 512
      %27 = vsyncadd [#allocation7], %s26
      %s28 = sshll.u32 [#allocation6], 4
      %s29 = int_to_ptr.vmem [resolvable:$true] %s28
      %34 = dma.hbm_to_vmem [thread:$0]  %s1, 512, %s29, [#allocation7], 128, 128, 8
    $region9: #{tpu_custom_call.1} parent=1 // pred_fallthru
      _
    // Predicated region
    $region10: #{tpu_custom_call.1} parent=1 // pred_check
      _
    $region11: #{tpu_custom_call.1} parent=1 // pred_check_branch
      %36 = sbr.rel (0) target = $region13
    $region12: #{tpu_custom_call.1} parent=1 // pred_region
      _
    $region13: #{tpu_custom_call.1} parent=1 // pred_fallthru
      _
    // Predicated region
    $region14: #{tpu_custom_call.1} parent=1 // pred_check
      _
    $region15: #{tpu_custom_call.1} parent=1 // pred_check_branch
      %38 = sbr.rel (0) target = $region17
    $region16: #{tpu_custom_call.1} parent=1 // pred_region
      %39 = dma.done [#allocation4], 512
    $region17: #{tpu_custom_call.1} parent=1 // pred_fallthru
      _
    // Predicated region
    $region18: #{tpu_custom_call.1} parent=1 // pred_check
      _
    $region19: #{tpu_custom_call.1} parent=1 // pred_check_branch
      %41 = sbr.rel (0) target = $region21
    $region20: #{tpu_custom_call.1} parent=1 // pred_region
      %42 = dma.done [#allocation7], 512
    $region21: #{tpu_custom_call.1} parent=1 // pred_fallthru
      _
    %p43 = scmp.eq.s32.totalorder 0, 0
    // Predicated region
    $region22: #{tpu_custom_call.1} parent=1 // pred_check
      %p44 = pneg %p43
    $region23: #{tpu_custom_call.1} parent=1 // pred_check_branch
      %46 = sbr.rel (%p44) target = $region25
    $region24: #{tpu_custom_call.1} parent=1 // pred_region
      %vm47 = vcmask 261120
      %48 = vst.msk [vmem:[#allocation2] sm:$0xff] %vm47, 0.0
      %49 = vst.msk [vmem:[#allocation2 + $0x8] sm:$0xff] %vm47, 0.0
      %50 = vst.msk [vmem:[#allocation2 + $0x10] sm:$0xff] %vm47, 0.0
      %51 = vst.msk [vmem:[#allocation2 + $0x18] sm:$0xff] %vm47, 0.0
    $region25: #{tpu_custom_call.1} parent=1 // pred_fallthru
      _
    %v52 = vld [vmem:[#allocation2] sm:$0xff]
    %v53 = vld [vmem:[#allocation2 + $0x8] sm:$0xff]
    %v54 = vld [vmem:[#allocation2 + $0x10] sm:$0xff]
    %v55 = vld [vmem:[#allocation2 + $0x18] sm:$0xff]
    %v56 = vld [vmem:[#allocation3] sm:$0xff]
    %v57 = vld [vmem:[#allocation3 + $0x8] sm:$0xff]
    %v58 = vld [vmem:[#allocation3 + $0x10] sm:$0xff]
    %v59 = vld [vmem:[#allocation3 + $0x18] sm:$0xff]
    %v60 = vld [vmem:[#allocation6] sm:$0xff]
    %v61 = vld [vmem:[#allocation6 + $0x8] sm:$0xff]
    %v62 = vld [vmem:[#allocation6 + $0x10] sm:$0xff]
    %v63 = vld [vmem:[#allocation6 + $0x18] sm:$0xff]
    %vm64 = vcmask 261120
    %v66 = vsel %vm64, %v56, 0
    %v69 = vsel %vm64, %v57, 0
    %v72 = vsel %vm64, %v58, 0
    %v75 = vsel %vm64, %v59, 0
    %77 = vmatprep.subr.mxu0 0.0
    %78 = vmatpush1.msra.mxu0 %v60
    %79 = vmatprep.subr.mxu0 0.0
    %80 = vmatpush1.msra.mxu0 %v61
    %81 = vmatprep.subr.mxu0 0.0
    %82 = vmatpush1.msra.mxu0 %v62
    %83 = vmatprep.subr.mxu0 0.0
    %84 = vmatpush1.msra.mxu0 %v63
    %85 = vmatprep.subr.mxu0 0.0
    %86 = vmatpush1.msra.mxu0 0.0
    %87 = vmatprep.subr.mxu0 0.0
    %88 = vmatpush1.msra.mxu0 0.0
    %89 = vmatprep.subr.mxu0 0.0
    %90 = vmatpush1.msra.mxu0 0.0
    %91 = vmatprep.subr.mxu0 0.0
    %92 = vmatpush1.msra.mxu0 0.0
    %93 = vmatprep.subr.mxu0 0.0
    %94 = vmatpush1.msra.mxu0 0.0
    %95 = vmatprep.subr.mxu0 0.0
    %96 = vmatpush1.msra.mxu0 0.0
    %97 = vmatprep.subr.mxu0 0.0
    %98 = vmatpush1.msra.mxu0 0.0
    %99 = vmatprep.subr.mxu0 0.0
    %100 = vmatpush1.msra.mxu0 0.0
    %101 = vmatprep.subr.mxu0 0.0
    %102 = vmatpush1.msra.mxu0 0.0
    %103 = vmatprep.subr.mxu0 0.0
    %104 = vmatpush1.msra.mxu0 0.0
    %105 = vmatprep.subr.mxu0 0.0
    %106 = vmatpush1.msra.mxu0 0.0
    %107 = vmatprep.subr.mxu0 0.0
    %108 = vmatpush1.msra.mxu0 0.0
    %109 = vmatprep.subr.mxu0 0.0
    %110 = vmatpush1.msra.mxu0 0.0
    %111 = vmatprep.subr.mxu0 0.0
    %112 = vmatpush1.msra.mxu0 0.0
    %113 = vmatprep.subr.mxu0 0.0
    %114 = vmatpush1.msra.mxu0 0.0
    %115 = vmatprep.subr.mxu0 0.0
    %116 = vmatpush1.msra.mxu0 0.0
    %117 = vmatprep.subr.mxu0 0.0
    %118 = vmatpush1.msra.mxu0 0.0
    %119 = vmatprep.subr.mxu0 0.0
    %120 = vmatpush1.msra.mxu0 0.0
    %121 = vmatprep.subr.mxu0 0.0
    %122 = vmatpush1.msra.mxu0 0.0
    %123 = vmatprep.subr.mxu0 0.0
    %124 = vmatpush1.msra.mxu0 0.0
    %125 = vmatprep.subr.mxu0 0.0
    %126 = vmatpush1.msra.mxu0 0.0
    %127 = vmatprep.subr.mxu0 0.0
    %128 = vmatpush1.msra.mxu0 0.0
    %129 = vmatprep.subr.mxu0 0.0
    %130 = vmatpush1.msra.mxu0 0.0
    %131 = vmatprep.subr.mxu0 0.0
    %132 = vmatpush1.msra.mxu0 0.0
    %133 = vmatprep.subr.mxu0 0.0
    %134 = vmatpush1.msra.mxu0 0.0
    %135 = vmatprep.subr.mxu0 0.0
    %136 = vmatpush1.msra.mxu0 0.0
    %137 = vmatprep.subr.mxu0 0.0
    %138 = vmatpush1.msra.mxu0 0.0
    %139 = vmatprep.subr.mxu0 0.0
    %140 = vmatpush1.msra.mxu0 0.0
    %141 = vmatprep.mubr.f32.mxu0 0.0
    %142 = vmatmul.mubr.f32.gmra.mrb[0].mxu0 %v66
    %v143 = vpop.f32.mrb[0].mxu0
    %v144 = vadd.f32 0.0, %v143
    %v145 = vpop.f32.mrb[0].mxu0
    %146 = vmatprep.mubr.f32.mxu0 0.0
    %147 = vmatmul.mubr.f32.gmra.mrb[0].mxu0 %v69
    %v148 = vpop.f32.mrb[0].mxu0
    %v149 = vadd.f32 0.0, %v148
    %v150 = vpop.f32.mrb[0].mxu0
    %151 = vmatprep.mubr.f32.mxu0 0.0
    %152 = vmatmul.mubr.f32.gmra.mrb[0].mxu0 %v72
    %v153 = vpop.f32.mrb[0].mxu0
    %v154 = vadd.f32 0.0, %v153
    %v155 = vpop.f32.mrb[0].mxu0
    %156 = vmatprep.mubr.f32.mxu0 0.0
    %157 = vmatmul.mubr.f32.gmra.mrb[0].mxu0 %v75
    %v158 = vpop.f32.mrb[0].mxu0
    %v159 = vadd.f32 0.0, %v158
    %v160 = vpop.f32.mrb[0].mxu0
    %161 = vdwg.mxu0
    %v162 = vadd.f32 %v52, %v144
    %v163 = vadd.f32 %v53, %v149
    %v164 = vadd.f32 %v54, %v154
    %v165 = vadd.f32 %v55, %v159
    %166 = vst.msk [vmem:[#allocation2] sm:$0xff] %vm64, %v162
    %167 = vst.msk [vmem:[#allocation2 + $0x8] sm:$0xff] %vm64, %v163
    %168 = vst.msk [vmem:[#allocation2 + $0x10] sm:$0xff] %vm64, %v164
    %169 = vst.msk [vmem:[#allocation2 + $0x18] sm:$0xff] %vm64, %v165
    // Predicated region
    $region26: #{tpu_custom_call.1} parent=1 // pred_check
      %p170 = pneg %p43
    $region27: #{tpu_custom_call.1} parent=1 // pred_check_branch
      %172 = sbr.rel (%p170) target = $region29
    $region28: #{tpu_custom_call.1} parent=1 // pred_region
      %v173 = vld [vmem:[#allocation2] sm:$0xff]
      %v174 = vld [vmem:[#allocation2 + $0x8] sm:$0xff]
      %v175 = vld [vmem:[#allocation2 + $0x10] sm:$0xff]
      %v176 = vld [vmem:[#allocation2 + $0x18] sm:$0xff]
      %v177 = vld [vmem:[%s2] sm:$0x1]
      %v179 = vlaneseq
      %v180 = vshrl.u32 %v179, 7
      %v181 = vsub.s32 0, %v180
      %v182 = vrot.slane %v177, %v181
      %v184 = vadd.f32 %v173, %v182
      %v185 = vadd.f32 %v174, %v182
      %v186 = vadd.f32 %v175, %v182
      %v187 = vadd.f32 %v176, %v182
      %188 = vst.msk [vmem:[#allocation8] sm:$0xff] %vm64, %v184
      %189 = vst.msk [vmem:[#allocation8 + $0x8] sm:$0xff] %vm64, %v185
      %190 = vst.msk [vmem:[#allocation8 + $0x10] sm:$0xff] %vm64, %v186
      %191 = vst.msk [vmem:[#allocation8 + $0x18] sm:$0xff] %vm64, %v187
    $region29: #{tpu_custom_call.1} parent=1 // pred_fallthru
      _
    // Predicated region
    $region30: #{tpu_custom_call.1} parent=1 // pred_check
      _
    $region31: #{tpu_custom_call.1} parent=1 // pred_check_branch
      %193 = sbr.rel (0) target = $region33
    $region32: #{tpu_custom_call.1} parent=1 // pred_region
      %s195 = ssub.s32 512, 512
      %196 = vsyncadd [#allocation5], %s195
      %s197 = sshll.u32 [#allocation8], 4
      %s198 = int_to_ptr.vmem [resolvable:$true] %s197
      %203 = dma.vmem_to_hbm [thread:$0]  %s198, 512, %s3, [#allocation5], 128, 128, 8
    $region33: #{tpu_custom_call.1} parent=1 // pred_fallthru
      _
    // Predicated region
    $region34: #{tpu_custom_call.1} parent=1 // pred_check
      _
    $region35: #{tpu_custom_call.1} parent=1 // pred_check_branch
      %205 = sbr.rel (0) target = $region37
    $region36: #{tpu_custom_call.1} parent=1 // pred_region
      %206 = dma.done [#allocation5], 512
    $region37: #{tpu_custom_call.1} parent=1 // pred_fallthru
      _
    %207 = vsyncpa [#allocation4], 1
    %208 = vsyncpa [#allocation7], 1
    %209 = vsyncpa [#allocation5], 1

</llo_original>
